<compile_context>
chip_gen: v7x
topology: tpu7x:2x2x1
jax: 0.10.0
libtpu: 0.0.40
codegen_flags: <defaults>
</compile_context>

<pallas_src>
import math

import jax
import jax.numpy as jnp
from jax.experimental import pallas as pl
from jax.experimental.pallas import tpu as pltpu


_LANE = 128
_TARGET_STEP_BYTES = 2 << 20      # ~2 MiB of (input + output) per grid step
_MIN_GRID_STEPS = 8               # keep both v7x TCs busy + real pipelining
_SMALL_FAST_PATH_BYTES = 256 << 10  # below this, skip pallas_call entirely


def _make_sep_kernel(group_rows):
    """Kernel computing per-group products of sin(2*pi*x) over slab rows."""
    two_pi = 2.0 * math.pi

    def kernel(x_ref, f_ref):
        x = x_ref[...]                                   # (R, TILE_N)
        s = jnp.sin(two_pi * x.astype(jnp.float32))      # compute in f32
        for g, grp in enumerate(group_rows):             # static unroll
            p = s[grp[0]:grp[0] + 1, :]                  # (1, TILE_N)
            for r in grp[1:]:
                p = p * s[r:r + 1, :]
            f_ref[g:g + 1, :] = p.astype(f_ref.dtype)    # direct row store

    return kernel


def _choose_tile_n(N, R, G, itemsize):
    """Lane-tile sized by a bytes-per-step budget, clamped to >=8 grid steps."""
    n128 = -(-N // _LANE) * _LANE
    bytes_per_lane = (R + G) * itemsize
    budget = max(_LANE, (_TARGET_STEP_BYTES // bytes_per_lane) // _LANE * _LANE)
    by_steps = max(_LANE, (n128 // _MIN_GRID_STEPS) // _LANE * _LANE)
    return min(budget, by_steps, n128)


def _poixd_sep_pallas(x_slab, group_rows):
    """x_slab: (R, N) lane-dense slab of x-columns. Returns (G, N) products."""
    R, N = x_slab.shape
    G = len(group_rows)
    itemsize = jnp.dtype(x_slab.dtype).itemsize
    tile_n = _choose_tile_n(N, R, G, itemsize)

    muls = sum(len(g) - 1 for g in group_rows)
    cost = pl.CostEstimate(
        flops=(R + muls) * N,
        transcendentals=R * N,
        bytes_accessed=(R + G) * N * itemsize,
    )

    return pl.pallas_call(
        _make_sep_kernel(group_rows),
        out_shape=jax.ShapeDtypeStruct((G, N), x_slab.dtype),
        grid=(pl.cdiv(N, tile_n),),
        in_specs=[pl.BlockSpec((R, tile_n), lambda i: (0, i))],
        out_specs=pl.BlockSpec((G, tile_n), lambda i: (0, i)),
        compiler_params=pltpu.CompilerParams(
            dimension_semantics=("parallel",)),
        cost_estimate=cost,
    )(x_slab)


def _sep_plain_jnp(x_slab, group_rows, out_dtype):
    """Small-N fast path: plain jnp sin-products, fused by XLA."""
    s = jnp.sin((2.0 * math.pi) * x_slab.astype(jnp.float32))
    rows = []
    for grp in group_rows:
        p = s[grp[0]]
        for r in grp[1:]:
            p = p * s[r]
        rows.append(p)
    return jnp.stack(rows, axis=0).astype(out_dtype)


def poixd_homogen_tensor_sep(quad_x, quad_concat, param_a, *, force_pallas=None):
    """JAX/Pallas equivalent of PoiXd_homogen_tensor_sep.forward.

    quad_x:      list of arrays, each (N, C); only column 0 is used.
    quad_concat: static list of index-lists (groups of separable dimensions).
    param_a:     array of any shape / dtype.
    force_pallas: None -> auto (small-N fast path in plain jnp); True/False
                  to force/skip the Pallas kernel.
    Returns (list_sep_f, mult_coeff) with list_sep_f[i] of shape (N, 1).
    """
    N = quad_x[0].shape[0]

    used = sorted({int(d) for grp in quad_concat for d in grp})
    row_of = {d: r for r, d in enumerate(used)}
    group_rows = tuple(tuple(row_of[int(d)] for d in grp) for grp in quad_concat)
    R, G = len(used), len(quad_concat)

    # TODO(synk): ideally upstream hands the x-columns as a contiguous
    # (num_dims, N) slab; this strided column gather is the remaining
    # wrapper-side HBM round-trip flagged by the perf review.
    x_slab = jnp.stack([quad_x[d][:, 0] for d in used], axis=0)

    itemsize = jnp.dtype(x_slab.dtype).itemsize
    small = (R + G) * N * itemsize < _SMALL_FAST_PATH_BYTES
    use_pallas = (not small) if force_pallas is None else force_pallas

    if use_pallas:
        sep = _poixd_sep_pallas(x_slab, group_rows)
    else:
        sep = _sep_plain_jnp(x_slab, group_rows, x_slab.dtype)

    list_sep_f = [sep[g, :].reshape(N, 1) for g in range(G)]

    # Trivial independent elementwise op: leave to XLA (preserves param_a dtype).
    mult_coeff = (-4.0 * math.pi ** 2) * param_a
    return list_sep_f, mult_coeff


if __name__ == "__main__":
    # N deliberately not a multiple of 128 so the ragged final block and the
    # multi-step grid are both exercised; force_pallas=True so the kernel runs
    # even though N is small enough for the fast path.
    N = 777
    C = 3
    quad_concat = [[0, 1], [2]]   # two separable groups over three dimensions
    num_dims = 3

    key = jax.random.PRNGKey(0)
    keys = jax.random.split(key, num_dims + 1)
    quad_x = [jax.random.uniform(keys[i], (N, C), dtype=jnp.float32)
              for i in range(num_dims)]
    param_a = jax.random.normal(keys[num_dims], (N,), dtype=jnp.float32)

    list_sep_f, mult_coeff = poixd_homogen_tensor_sep(
        quad_x, quad_concat, param_a, force_pallas=True)
    for f in list_sep_f:
        jax.block_until_ready(f)
    jax.block_until_ready(mult_coeff)

    # Reference (plain JAX, semantics identical to the torch module).
    two_pi = 2.0 * math.pi
    ref_f = []
    for grp in quad_concat:
        a = jnp.sin(two_pi * quad_x[grp[0]][:, 0])
        for d in grp[1:]:
            a = a * jnp.sin(two_pi * quad_x[d][:, 0])
        ref_f.append(a.reshape(N, 1))
    ref_c = -1.0 * param_a * 4.0 * math.pi ** 2

    for f, rf in zip(list_sep_f, ref_f):
        assert f.shape == rf.shape, "sep_f shape mismatch"
        assert jnp.allclose(f, rf, atol=1e-5, rtol=1e-5), "sep_f mismatch"
    assert jnp.allclose(mult_coeff, ref_c, atol=1e-5, rtol=1e-5), "mult_coeff mismatch"

    # Also sanity-check the auto (small-N fast) path.
    list_fast, coeff_fast = poixd_homogen_tensor_sep(quad_x, quad_concat, param_a)
    for f, rf in zip(list_fast, ref_f):
        assert jnp.allclose(f, rf, atol=1e-5, rtol=1e-5), "fast-path sep_f mismatch"
    assert jnp.allclose(coeff_fast, ref_c, atol=1e-5, rtol=1e-5), "fast-path coeff mismatch"

    print("KERNEL_OK")
</pallas_src>

<mosaic_0001>
module attributes {stable_mosaic.version = 11 : i64} {
  func.func @kernel(%arg0: i32, %arg1: memref<3x128xf32, #tpu.memory_space<vmem>>, %arg2: memref<2x128xf32, #tpu.memory_space<vmem>>) attributes {dimension_semantics = [#tpu.dimension_semantics<parallel>], iteration_bounds = array<i64: 7>, scalar_prefetch = 0 : i64, scratch_operands = 0 : i64, tpu.core_type = #tpu.core_type<tc>, window_params = [{transform_indices = @transform_0, window_bounds = array<i64: 3, 128>}, {transform_indices = @transform_1, window_bounds = array<i64: 2, 128>}]} {
    %c0 = arith.constant 0 : index
    %c0_0 = arith.constant 0 : index
    %0 = vector.load %arg1[%c0, %c0_0] : memref<3x128xf32, #tpu.memory_space<vmem>>, vector<3x128xf32>
    %cst = arith.constant 6.28318548 : f32
    %1 = vector.broadcast %cst : f32 to vector<3x128xf32>
    %2 = arith.mulf %1, %0 : vector<3x128xf32>
    %3 = math.sin %2 : vector<3x128xf32>
    %4 = vector.extract_strided_slice %3 {offsets = [0, 0], sizes = [1, 128], strides = [1, 1]} : vector<3x128xf32> to vector<1x128xf32>
    %5 = vector.extract_strided_slice %3 {offsets = [1, 0], sizes = [1, 128], strides = [1, 1]} : vector<3x128xf32> to vector<1x128xf32>
    %6 = arith.mulf %4, %5 : vector<1x128xf32>
    %c0_1 = arith.constant 0 : index
    %c0_2 = arith.constant 0 : index
    %7 = vector.load %arg2[%c0_1, %c0_2] : memref<2x128xf32, #tpu.memory_space<vmem>>, vector<1x128xf32>
    tpu.vector_store %arg2[%c0_1, %c0_2], %6 {strides = array<i32>} : memref<2x128xf32, #tpu.memory_space<vmem>>, vector<1x128xf32>,
    %8 = vector.extract_strided_slice %3 {offsets = [2, 0], sizes = [1, 128], strides = [1, 1]} : vector<3x128xf32> to vector<1x128xf32>
    %c1 = arith.constant 1 : index
    %c0_3 = arith.constant 0 : index
    %9 = vector.load %arg2[%c1, %c0_3] : memref<2x128xf32, #tpu.memory_space<vmem>>, vector<1x128xf32>
    tpu.vector_store %arg2[%c1, %c0_3], %8 {strides = array<i32>} : memref<2x128xf32, #tpu.memory_space<vmem>>, vector<1x128xf32>,
    return
  }
  func.func @transform_0(%arg0: i32) -> (i32, i32) {
    %c0_i32 = arith.constant 0 : i32
    %c0_i32_0 = arith.constant 0 : i32
    return %c0_i32, %arg0 : i32, i32
  }
  func.func @transform_1(%arg0: i32) -> (i32, i32) {
    %c0_i32 = arith.constant 0 : i32
    %c0_i32_0 = arith.constant 0 : i32
    return %c0_i32, %arg0 : i32, i32
  }
}

</mosaic_0001>

<llo_original>
// kernel: tpu_custom_call.1
$region0: #{tpu_custom_call.1}
  #allocation0 [shape = 'u32[]', space=smem, size = 0x4, offset = 0x4, fixed_abs, tag = 'smem constant byte address 0x4 - core index']
  #allocation1 [shape = 'u32[144,128]{1,0:T(1,128)}', space=vmem, size = 0x12000, scoped, tag = 'internal scratch']
  %s0 = inlined_call_operand.hbm [shape: f32[3,777], index: 0, kind: input, shape index: {}]
  %s1 = inlined_call_operand.hbm [shape: f32[2,777], index: 1, kind: output, shape index: {}]
  %s2 = sld [smem:[#allocation0]]
  $region41: #{tpu_custom_call.1} parent=0
    _
  %s4 = ssub.s32 1, %s2
  %s5 = scalar_select 0, %s4, %s2
  $region1: #{tpu_custom_call.1} parent=0
    #allocation2 [shape = 'u8[4096]{0}', space=vmem, size = 0x1000, scoped, tag = 'input window, operand 0']
    #allocation3 [shape = 's32[2]{0}', space=sflag, size = 0x8, scoped, tag = 'scoped memory for tpu_custom_call.1']
    #allocation4 [shape = 's32[2]{0}', space=sflag, size = 0x8, scoped, tag = 'scoped memory for tpu_custom_call.1']
    #allocation5 [shape = 'u8[2048]{0}', space=vmem, size = 0x800, scoped, tag = 'output window, operand 0']
    %6 = vsyncpa [#allocation3], 0
    %s7 = scalar_lea.sflag [#allocation3], 1
    %8 = vsyncpa %s7, 0
    %9 = vsyncpa [#allocation4], 0
    %s10 = scalar_lea.sflag [#allocation4], 1
    %11 = vsyncpa %s10, 0
    loop: start=0, step=1, limit=9
    $region2: #{tpu_custom_call.1} parent=1 // loop_pre_header
      _
    $region3: #{tpu_custom_call.1} parent=1 // loop_header
      %s13 = sphi 0, %s17
      %p14 = scmp.ge.s32.totalorder %s13, 9
      %s23 = sphi 0, %s25
      %s26 = sphi 0, %s23
      %s27 = sphi 0, %s26
      %s43 = sphi 0, %s27
      %s49 = sphi 0, %s51
      %s52 = sphi 0, %s49
      %s53 = sphi 0, %s52
      %s69 = sphi 0, %s53
    $region4: #{tpu_custom_call.1} parent=1 // loop_header_branch
      %16 = sbr.rel (%p14) target = $region8
    $region5: #{tpu_custom_call.1} parent=1 // loop_body
      %s18 = ssub.s32 %s13, 1
      %s19 = ssub.s32 %s13, 2
      %s20 = sadd.s32 %s13, 1
      %s21 = ssub.s32 %s13, %s20
      %p22 = scmp.eq.s32.totalorder %s21, 0
      %s24 = sadd.s32 %s23, 1
      %s25 = scalar_select %p22, %s23, %s24
      %p28 = pneg %p22
      %p29 = scmp.eq.s32.totalorder %s13, 6
      %p30 = por %p28, %p29
      %p31 = scmp.ne.s32.totalorder %s23, %s26
      %p32 = scmp.eq.s32.totalorder %s13, 0
      %p33 = por %p31, %p32
      %p34 = scmp.ne.s32.totalorder %s23, %s26
      %p35 = scmp.eq.s32.totalorder %s18, 6
      %p36 = por %p34, %p35
      %p37 = scmp.ne.s32.totalorder %s26, %s27
      %p38 = scmp.eq.s32.totalorder %s18, 0
      %p39 = por %p37, %p38
      %p40 = scmp.ne.s32.totalorder %s26, %s27
      %p41 = scmp.eq.s32.totalorder %s19, 6
      %p42 = por %p40, %p41
      %p44 = scmp.ne.s32.totalorder %s27, %s43
      %p45 = scmp.eq.s32.totalorder %s19, 0
      %p46 = por %p44, %p45
      %s47 = ssub.s32 %s13, %s20
      %p48 = scmp.eq.s32.totalorder %s47, 0
      %s50 = sadd.s32 %s49, 1
      %s51 = scalar_select %p48, %s49, %s50
      %p54 = pneg %p48
      %p55 = scmp.eq.s32.totalorder %s13, 6
      %p56 = por %p54, %p55
      %p57 = scmp.ne.s32.totalorder %s49, %s52
      %p58 = scmp.eq.s32.totalorder %s13, 0
      %p59 = por %p57, %p58
      %p60 = scmp.ne.s32.totalorder %s49, %s52
      %p61 = scmp.eq.s32.totalorder %s18, 6
      %p62 = por %p60, %p61
      %p63 = scmp.ne.s32.totalorder %s52, %s53
      %p64 = scmp.eq.s32.totalorder %s18, 0
      %p65 = por %p63, %p64
      %p66 = scmp.ne.s32.totalorder %s52, %s53
      %p67 = scmp.eq.s32.totalorder %s19, 6
      %p68 = por %p66, %p67
      %p70 = scmp.ne.s32.totalorder %s53, %s69
      %p71 = scmp.eq.s32.totalorder %s19, 0
      %p72 = por %p70, %p71
      %p73 = scmp.le.s32.totalorder 1, %s13
      %p74 = scmp.lt.s32.totalorder %s13, 8
      %p75 = pnand %p73, %p74
      %p76 = pneg %p75
      // Predicated region
      $region9: #{tpu_custom_call.1} parent=5 // pred_check
        _
      $region10: #{tpu_custom_call.1} parent=5 // pred_check_branch
        %78 = sbr.rel (%p75) target = $region12
      $region11: #{tpu_custom_call.1} parent=5 // pred_region
        %s79 = ssub.s32 %s13, 1
      $region12: #{tpu_custom_call.1} parent=5 // pred_fallthru
        _
      %p80 = scmp.lt.s32.totalorder %s13, 7
      // Predicated region
      $region13: #{tpu_custom_call.1} parent=5 // pred_check
        %p81 = pneg %p80
      $region14: #{tpu_custom_call.1} parent=5 // pred_check_branch
        %83 = sbr.rel (%p81) target = $region16
      $region15: #{tpu_custom_call.1} parent=5 // pred_region
        // Predicated region
        $region17: #{tpu_custom_call.1} parent=15 // pred_check
          %p84 = pneg %p33
        $region18: #{tpu_custom_call.1} parent=15 // pred_check_branch
          %86 = sbr.rel (%p84) target = $region20
        $region19: #{tpu_custom_call.1} parent=15 // pred_region
          %s87 = sand.u32 %s23, 1
          %s88 = scalar_lea.sflag [#allocation3], %s87
          %s89 = sand.u32 %s23, 1
          %s90 = smul.addr %s89, 4
          %s91 = scalar_lea.vmem [#allocation2], %s90
          %s93 = ssub.s32 64, 64
          %94 = vsyncadd %s88, %s93
          %s95 = smul.addr %s13, 64
          %s96 = scalar_lea.hbm %s0, %s95
          %s98 = sshll.u32 %s91, 4
          %s99 = int_to_ptr.vmem [resolvable:$true] %s98
          %101 = dma.hbm_to_vmem [thread:$0]  %s96, 64, %s99, %s88
        $region20: #{tpu_custom_call.1} parent=15 // pred_fallthru
          _
      $region16: #{tpu_custom_call.1} parent=5 // pred_fallthru
        _
      %p102 = scmp.le.s32.totalorder 1, %s13
      %p103 = scmp.lt.s32.totalorder %s13, 8
      %p104 = pnand %p102, %p103
      %p105 = pneg %p104
      // Predicated region
      $region21: #{tpu_custom_call.1} parent=5 // pred_check
        _
      $region22: #{tpu_custom_call.1} parent=5 // pred_check_branch
        %107 = sbr.rel (%p104) target = $region24
      $region23: #{tpu_custom_call.1} parent=5 // pred_region
        %s108 = ssub.s32 %s13, 1
        %s109 = sand.u32 %s26, 1
        %s110 = scalar_lea.sflag [#allocation3], %s109
        %s111 = sand.u32 %s26, 1
        %s112 = smul.addr %s111, 4
        %s113 = scalar_lea.vmem [#allocation2], %s112
        // Predicated region
        $region25: #{tpu_custom_call.1} parent=23 // pred_check
          %p114 = pneg %p39
        $region26: #{tpu_custom_call.1} parent=23 // pred_check_branch
          %116 = sbr.rel (%p114) target = $region28
        $region27: #{tpu_custom_call.1} parent=23 // pred_region
          %117 = dma.done %s110, 64
        $region28: #{tpu_custom_call.1} parent=23 // pred_fallthru
          _
        %s118 = sand.u32 %s26, 1
        %s119 = scalar_lea.sflag [#allocation3], %s118
        %s120 = sand.u32 %s26, 1
        %s121 = smul.addr %s120, 4
        %s122 = scalar_lea.vmem [#allocation2], %s121
        %p123 = pneg %p39
        %p124 = pneg %p36
        %p125 = pneg %p65
        %p126 = pneg %p62
        %s127 = sand.u32 %s52, 1
        %s128 = scalar_lea.sflag [#allocation4], %s127
        %s129 = sand.u32 %s52, 1
        %s130 = smul.addr %s129, 2
        %s131 = scalar_lea.vmem [#allocation5], %s130
        %v132 = vld [vmem:[%s113] sm:$0x7]
        %v133 = vmul.f32 %v132, 6.2831855
        %v134 = vand.u32 2147483647, %v133
        %vm135 = vcmp.le.f32.partialorder %v134, 0.7853982
        %vm136 = vcmp.lt.s32.totalorder %v133, 0
        %v137 = vand.u32 %v133, 2139095040
        %v138 = vshrl.u32 %v137, 23
        %v139 = vsub.s32 %v138, 127
        %v140 = vand.u32 2147483647, %v133
        %v141 = vand.u32 %v140, 8388607
        %v142 = vor.u32 %v141, 8388608
        %v143 = vsub.s32 0, %v142
        %v144 = vadd.s32 %v139, 1
        %vm145 = vcmp.gt.s32.totalorder %v144, 0
        %v146 = vsel %vm145, %v144, 0
        %v147 = vshrl.u32 %v146, 5
        %v148 = vand.u32 %v146, 31
        %v149 = vsub.s32 32, %v148
        %v150 = vshrl.u32 683565275, %v149
        %v151 = vshll.u32 683565275, %v148
        %v152 = vshrl.u32 2475754826, %v149
        %v153 = vor.u32 %v151, %v152
        %v154 = vshll.u32 2475754826, %v148
        %v155 = vshrl.u32 2131351028, %v149
        %v156 = vor.u32 %v154, %v155
        %v157 = vshll.u32 2131351028, %v148
        %v158 = vshrl.u32 2102212464, %v149
        %v159 = vor.u32 %v157, %v158
        %v160 = vshll.u32 2102212464, %v148
        %v161 = vshrl.u32 920167782, %v149
        %v162 = vor.u32 %v160, %v161
        %v163 = vshll.u32 920167782, %v148
        %v164 = vshrl.u32 1326507024, %v149
        %v165 = vor.u32 %v163, %v164
        %vm166 = vcmp.lt.s32.totalorder %v147, 1
        %vm167 = vcmp.lt.s32.totalorder %v147, 2
        %vm168 = vcmp.lt.s32.totalorder %v147, 3
        %vm169 = vcmp.lt.s32.totalorder %v147, 4
        %v170 = vsel %vm166, %v150, %v153
        %v171 = vsel %vm169, %v159, 2102212464
        %v172 = vsel %vm168, %v156, %v171
        %v173 = vsel %vm167, %v170, %v172
        %v174 = vsel %vm166, %v153, %v156
        %v175 = vsel %vm169, %v162, 920167782
        %v176 = vsel %vm168, %v159, %v175
        %v177 = vsel %vm167, %v174, %v176
        %v178 = vsel %vm166, %v156, %v159
        %v179 = vsel %vm169, %v165, 1326507024
        %v180 = vsel %vm168, %v162, %v179
        %v181 = vsel %vm167, %v178, %v180
        %v182 = vshll.u32 %v142, 8
        %v183 = vmul.u32.u64.compose %v182, %v181
        %v184 = vextract.low.u32 %v183
        %v185 = vextract.high.u32 %v183
        %v186 = vmul.u32.u64.compose %v182, %v177
        %v187 = vextract.low.u32 %v186
        %v188 = vextract.high.u32 %v186
        %v189 = vmul.u32 %v182, %v173
        %v190 = vadd.s32 %v185, %v187
        %vm191 = vc.u32 %v185, %v187
        %v192 = vadd.s32 %v188, 1
        %v193 = vsel %vm191, %v192, %v188
        %v194 = vadd.s32 %v189, %v193
        %v195 = vadd.s32 %v194, 536870912
        %v196 = vshrl.u32 %v195, 30
        %v197 = vshll.u32 %v196, 30
        %v198 = vsub.s32 %v194, %v197
        %vm199 = vcmp.lt.s32.totalorder %v198, 0
        %v200 = vsub.s32 0, %v198
        %v201 = vsel %vm199, %v200, %v198
        %v202 = vclz %v201
        %v203 = vsub.s32 %v202, 2
        %vm204 = vcmp.gt.s32.totalorder 0, %v203
        %v205 = vsel %vm204, 0, %v203
        %v206 = vsub.s32 32, %v205
        %v207 = vshll.u32 %v198, %v205
        %v208 = vshrl.u32 %v190, %v206
        %v209 = vor.u32 %v207, %v208
        %v210 = vsub.s32 4294967266, %v205
        %v211 = vadd.s32 %v210, 127
        %v212 = vshll.u32 %v211, 23
        %v213 = vor.u32 4788187, %v212
        %v214 = vand.u32 2147483647, %v213
        %v216 = vcvt.s32.f32 %v209
        %v217 = vmul.f32 %v216, %v214
        %v218 = vxor.u32 %v217, 2147483648
        %v219 = vsel %vm136, %v218, %v217
        %v220 = vsub.s32 4, %v196
        %v221 = vsel %vm136, %v220, %v196
        %v222 = vsel %vm135, %v133, %v219
        %v223 = vsel %vm135, 0, %v221
        %v224 = vcosq.f32.pop %v222
        %v225 = vsinq.f32.pop %v222
        %vm226 = vweird.f32 %v133
        %v227 = vadd.s32 %v223, 3
        %v228 = vand.u32 %v227, 3
        %vm229 = vcmp.lt.s32.totalorder %v228, 2
        %vm230 = vcmp.eq.s32.totalorder %v228, 0
        %v231 = vxor.u32 %v225, 2147483648
        %v232 = vsel %vm230, %v224, %v231
        %vm233 = vcmp.eq.s32.totalorder %v228, 2
        %v234 = vxor.u32 %v224, 2147483648
        %v235 = vsel %vm233, %v234, %v225
        %v236 = vsel %vm229, %v232, %v235
        %v237 = vsel %vm226, nan, %v236
        %v239 = vrot.slane %v237, 1
        %v241 = vmul.f32 %v237, %v239
        %242 = vst [vmem:[%s131] sm:$0x1] %v241
        %243 = vst [vmem:[%s131 - $0x1] sm:$0x4] %v237
        %s244 = sand.u32 %s52, 1
        %s245 = scalar_lea.sflag [#allocation4], %s244
        %s246 = sand.u32 %s52, 1
        %s247 = smul.addr %s246, 2
        %s248 = scalar_lea.vmem [#allocation5], %s247
        // Predicated region
        $region29: #{tpu_custom_call.1} parent=23 // pred_check
          %p249 = pneg %p62
        $region30: #{tpu_custom_call.1} parent=23 // pred_check_branch
          %251 = sbr.rel (%p249) target = $region32
        $region31: #{tpu_custom_call.1} parent=23 // pred_region
          %s253 = ssub.s32 32, 32
          %254 = vsyncadd %s245, %s253
          %s255 = smul.addr %s18, 32
          %s256 = scalar_lea.hbm %s1, %s255
          %s258 = sshll.u32 %s248, 4
          %s259 = int_to_ptr.vmem [resolvable:$true] %s258
          %261 = dma.vmem_to_hbm [thread:$0]  %s259, 32, %s256, %s245
        $region32: #{tpu_custom_call.1} parent=23 // pred_fallthru
          _
      $region24: #{tpu_custom_call.1} parent=5 // pred_fallthru
        _
      %p262 = scmp.le.s32.totalorder 2, %s13
      // Predicated region
      $region33: #{tpu_custom_call.1} parent=5 // pred_check
        %p263 = pneg %p262
      $region34: #{tpu_custom_call.1} parent=5 // pred_check_branch
        %265 = sbr.rel (%p263) target = $region36
      $region35: #{tpu_custom_call.1} parent=5 // pred_region
        %s266 = ssub.s32 %s13, 2
        // Predicated region
        $region37: #{tpu_custom_call.1} parent=35 // pred_check
          %p267 = pneg %p68
        $region38: #{tpu_custom_call.1} parent=35 // pred_check_branch
          %269 = sbr.rel (%p267) target = $region40
        $region39: #{tpu_custom_call.1} parent=35 // pred_region
          %s270 = sand.u32 %s53, 1
          %s271 = scalar_lea.sflag [#allocation4], %s270
          %s272 = sand.u32 %s53, 1
          %s273 = smul.addr %s272, 2
          %s274 = scalar_lea.vmem [#allocation5], %s273
          %275 = dma.done %s271, 32
        $region40: #{tpu_custom_call.1} parent=35 // pred_fallthru
          _
      $region36: #{tpu_custom_call.1} parent=5 // pred_fallthru
        _
    $region6: #{tpu_custom_call.1} parent=1 // loop_footer
      %s17 = sadd.s32 1, %s13
    $region7: #{tpu_custom_call.1} parent=1 // loop_footer_branch
      %12 = sbr.rel target = $region3
    $region8: #{tpu_custom_call.1} parent=1 // loop_exit
      _
    %276 = vsyncpa [#allocation3], 1
    %s277 = scalar_lea.sflag [#allocation3], 1
    %278 = vsyncpa %s277, 1
    %279 = vsyncpa [#allocation4], 1
    %s280 = scalar_lea.sflag [#allocation4], 1
    %281 = vsyncpa %s280, 1

</llo_original>
